<compile_context>
chip_gen: v7x
topology: tpu7x:2x2x1
jax: 0.10.0
libtpu: 0.0.40
codegen_flags: <defaults>
</compile_context>

<pallas_src>
import functools

import jax
import jax.numpy as jnp
from jax import lax
from jax.experimental import pallas as pl
from jax.experimental.pallas import tpu as pltpu


_NEG = -1e30      # finite "minus infinity" for masking padded columns (avoids inf-inf NaN)
_EPS_SQ = 1e-24   # F.normalize eps=1e-12, squared


def _l2_normalize(x):
    # x / max(||x||, eps) == x * rsqrt(max(sum_sq, eps^2)); rsqrt runs on the EUP.
    sumsq = jnp.sum(x * x, axis=-1, keepdims=True)
    return x * lax.rsqrt(jnp.maximum(sumsq, _EPS_SQ))


def _contrastive_partials_kernel(img_ref, txt_ref, acc_ref, shift_ref, colsum_ref,
                                 *, inv_temp, tile_rows, num_tiles, batch_real,
                                 single_exp, needs_mask, mxu_dtype):
    q = pl.program_id(0)

    # Image tile: normalize in f32, fold 1/temperature once, round to MXU dtype.
    img = img_ref[...].astype(jnp.float32)                        # (tq, D)
    img_b = (_l2_normalize(img) * inv_temp).astype(mxu_dtype)

    # Logits tile on the MXU: NT contraction, bf16 operands, f32 accumulation.
    txt_b = txt_ref[...]                                          # (Bp, D) pre-normalized bf16
    logits = lax.dot_general(
        img_b, txt_b,
        dimension_numbers=(((1,), (1,)), ((), ())),
        preferred_element_type=jnp.float32)                       # (tq, Bp)

    # Diagonal of this row tile, sliced from the resident text block (no extra
    # input, no redundant per-step normalization).  Same bf16-rounded operands
    # as the MXU, so it equals logits[i, i] up to accumulation order.
    if num_tiles == 1:
        txt_tile = txt_ref[...]
    else:
        start = pl.multiple_of(q * tile_rows, tile_rows)
        txt_tile = txt_ref[pl.ds(start, tile_rows), :]
    diag = jnp.sum(img_b.astype(jnp.float32) * txt_tile.astype(jnp.float32),
                   axis=-1, keepdims=True)                        # (tq, 1)

    if needs_mask:
        ncols = logits.shape[1]
        col_ids = lax.broadcasted_iota(jnp.int32, (1, ncols), 1)
        logits = jnp.where(col_ids < batch_real, logits, _NEG)
        row_ids = q * tile_rows + lax.broadcasted_iota(jnp.int32, (tile_rows, 1), 0)
        row_valid = row_ids < batch_real

    if single_exp:
        # |logits| <= inv_temp, so one scalar shift per tile is numerically safe
        # (guarded by 2*inv_temp <= 80 in the wrapper): a single exp serves both
        # the exact row LSE and the column partial sums.
        shift = jnp.max(jnp.max(logits, axis=1, keepdims=True),
                        axis=0, keepdims=True)                    # (1, 1)
        p = jnp.exp(logits - shift)                               # (tq, Bp)
        row_lse = shift + jnp.log(jnp.sum(p, axis=1, keepdims=True))
    else:
        # Fallback for tiny temperatures: exact per-row shift for the row LSE,
        # per-column shift for the column partials (two exps).
        row_max = jnp.max(logits, axis=1, keepdims=True)
        row_lse = row_max + jnp.log(
            jnp.sum(jnp.exp(logits - row_max), axis=1, keepdims=True))
        shift = jnp.max(logits, axis=0, keepdims=True)            # (1, Bp)
        p = jnp.exp(logits - shift)

    # sum_i(row_lse_i - 2*diag_i): the -2*diag also covers the text->image half.
    contrib = row_lse - 2.0 * diag                                # (tq, 1)
    if needs_mask:
        contrib = jnp.where(row_valid, contrib, 0.0)
        p = jnp.where(row_valid, p, 0.0)

    acc_ref[...] = jnp.sum(contrib, axis=0, keepdims=True).reshape(1, 1, 1)
    shift_ref[...] = shift.reshape(shift_ref.shape)
    colsum_ref[...] = jnp.sum(p, axis=0, keepdims=True).reshape(1, 1, -1)


def _round_up(x, m):
    return ((x + m - 1) // m) * m


def _vmem_capacity_bytes():
    try:
        return int(pltpu.get_tpu_info().vmem_capacity_bytes)
    except Exception:
        return 64 * 1024 * 1024   # conservative default (v7x per-core VMEM)


def _fits(tile_rows, b_pad, d, budget):
    resident_txt = b_pad * d * 2              # pre-normalized bf16, single-buffered
    img_tile = 2 * tile_rows * d * 4          # f32 input tile, double-buffered
    work = 4 * tile_rows * b_pad * 4          # logits + exp + select temporaries (f32)
    misc = 8 * tile_rows * d + 8 * b_pad
    return resident_txt + img_tile + work + misc <= budget


def _select_tiling(batch, d, vmem_limit):
    budget = int(0.85 * vmem_limit)
    if batch <= 1024 and _fits(batch, batch, d, budget):
        return batch, batch                    # single row tile, no padding / masking
    # 256-row granule: full MXU width on v6e/v7x and still a multiple of v5e's 128.
    b_pad = _round_up(batch, 256)
    for tile_rows in (1024, 512, 256):
        if b_pad % tile_rows == 0 and _fits(tile_rows, b_pad, d, budget):
            return tile_rows, b_pad
    # Last resort: v5e-sized 128-row tiles.
    # TODO(synk): column-tile the resident text (online row LSE) once b_pad*d*2
    # bytes alone no longer fits the per-core VMEM budget.
    return 128, _round_up(batch, 128)


_SINGLE_BUFFER_TEXT_OK = True   # flipped to False if pl.Buffered(1) is rejected


def contrastive_loss(image_embeds, text_embeds, temperature=0.07,
                     mxu_dtype=jnp.bfloat16, tile_rows=None):
    """image_embeds, text_embeds: (B, D). Returns a scalar float32 loss."""
    global _SINGLE_BUFFER_TEXT_OK

    batch, d = image_embeds.shape
    assert text_embeds.shape == (batch, d)
    inv_temp = float(1.0 / temperature)
    single_exp = (2.0 * inv_temp) <= 80.0   # guard against full-row exp underflow

    vmem_limit = int(0.75 * _vmem_capacity_bytes())
    if tile_rows is None:
        tile_rows, b_pad = _select_tiling(batch, d, vmem_limit)
    else:
        b_pad = _round_up(batch, tile_rows)
    num_tiles = b_pad // tile_rows
    if num_tiles > 1:
        # Keep dynamic diag slices / MXU tiles aligned (bf16 sublane packing).
        assert tile_rows % 128 == 0, tile_rows
    needs_mask = (b_pad != batch)

    # Normalize text ONCE here (not per grid step) and hand the kernel a
    # resident, pre-normalized bf16 block: halves its VMEM footprint and the
    # per-step VMEM->vreg traffic feeding the MXU.
    txt = _l2_normalize(text_embeds.astype(jnp.float32)).astype(mxu_dtype)
    img = image_embeds
    if needs_mask:
        pad = b_pad - batch
        img = jnp.pad(img, ((0, pad), (0, 0)))
        txt = jnp.pad(txt, ((0, pad), (0, 0)))

    kernel = functools.partial(
        _contrastive_partials_kernel,
        inv_temp=inv_temp, tile_rows=tile_rows, num_tiles=num_tiles,
        batch_real=batch, single_exp=single_exp, needs_mask=needs_mask,
        mxu_dtype=mxu_dtype)

    shift_cols = 1 if single_exp else b_pad
    out_shape = (jax.ShapeDtypeStruct((num_tiles, 1, 1), jnp.float32),
                 jax.ShapeDtypeStruct((num_tiles, 1, shift_cols), jnp.float32),
                 jax.ShapeDtypeStruct((num_tiles, 1, b_pad), jnp.float32))
    out_specs = (pl.BlockSpec((1, 1, 1), lambda q: (q, 0, 0)),
                 pl.BlockSpec((1, 1, shift_cols), lambda q: (q, 0, 0)),
                 pl.BlockSpec((1, 1, b_pad), lambda q: (q, 0, 0)))

    def run(single_buffer_text):
        text_kwargs = {}
        if single_buffer_text:
            # Constant block index -> double buffering would only waste VMEM.
            text_kwargs["pipeline_mode"] = pl.Buffered(1)
        in_specs = [
            pl.BlockSpec((tile_rows, d), lambda q: (q, 0)),
            pl.BlockSpec((b_pad, d), lambda q: (0, 0), **text_kwargs),
        ]
        return pl.pallas_call(
            kernel,
            grid=(num_tiles,),
            in_specs=in_specs,
            out_specs=out_specs,
            out_shape=out_shape,
            compiler_params=pltpu.CompilerParams(
                # Every row tile is independent (per-tile partial outputs), so
                # the axis is parallel and v7x can split it across both TCs.
                dimension_semantics=("parallel",),
                vmem_limit_bytes=vmem_limit),
        )(img, txt)

    if _SINGLE_BUFFER_TEXT_OK:
        try:
            acc_p, shift_p, colsum_p = run(True)
        except Exception:
            _SINGLE_BUFFER_TEXT_OK = False
            acc_p, shift_p, colsum_p = run(False)
    else:
        acc_p, shift_p, colsum_p = run(False)

    # O(B) merge of per-tile partials in plain JAX (negligible vs the kernel).
    global_shift = jnp.max(shift_p, axis=0)                                   # (1, sc)
    col_total = jnp.sum(colsum_p * jnp.exp(shift_p - global_shift), axis=0)   # (1, Bp)
    col_lse = global_shift + jnp.log(col_total)                               # (1, Bp)
    col_lse_sum = jnp.sum(col_lse[0, :batch])
    loss = (jnp.sum(acc_p) + col_lse_sum) * (0.5 / batch)
    return loss


def _reference_loss(image_embeds, text_embeds, temperature=0.07, mxu_dtype=None):
    """Pure-JAX reference. mxu_dtype=None reproduces the exact f32 PyTorch math;
    mxu_dtype=jnp.bfloat16 mirrors the kernel's bf16 MXU operand rounding."""
    inv_t = 1.0 / temperature
    img = image_embeds.astype(jnp.float32)
    txt = text_embeds.astype(jnp.float32)
    img = img / jnp.maximum(jnp.linalg.norm(img, axis=1, keepdims=True), 1e-12)
    txt = txt / jnp.maximum(jnp.linalg.norm(txt, axis=1, keepdims=True), 1e-12)
    a = img * inv_t
    b = txt
    if mxu_dtype is not None:
        a = a.astype(mxu_dtype).astype(jnp.float32)
        b = b.astype(mxu_dtype).astype(jnp.float32)
    logits = jnp.dot(a, b.T, precision="highest")
    diag = jnp.sum(a * b, axis=-1)
    loss_i2t = jnp.mean(jax.nn.logsumexp(logits, axis=1) - diag)
    loss_t2i = jnp.mean(jax.nn.logsumexp(logits, axis=0) - diag)
    return 0.5 * (loss_i2t + loss_t2i)


if __name__ == "__main__":
    root = jax.random.PRNGKey(0)

    def run_case(batch, d, temperature=0.07, tile_rows=None, check_f32=True):
        k1, k2 = jax.random.split(jax.random.fold_in(root, 131 * batch + d))
        img = jax.random.normal(k1, (batch, d), dtype=jnp.float32)
        txt = jax.random.normal(k2, (batch, d), dtype=jnp.float32)

        loss = jax.block_until_ready(
            contrastive_loss(img, txt, temperature=temperature, tile_rows=tile_rows))
        assert jnp.isfinite(loss), (batch, d, temperature, loss)

        # Tight check vs a reference that mirrors the bf16 MXU operand rounding.
        ref_b = _reference_loss(img, txt, temperature, mxu_dtype=jnp.bfloat16)
        assert jnp.allclose(loss, ref_b, atol=2e-3, rtol=2e-3), (batch, d, loss, ref_b)

        if check_f32:
            # Sanity check vs the exact f32 math (only bf16 MXU rounding differs).
            ref_f = _reference_loss(img, txt, temperature, mxu_dtype=None)
            assert jnp.allclose(loss, ref_f, atol=3e-2, rtol=2e-2), (batch, d, loss, ref_f)
        return loss

    # Small shapes consistent with the module's (batch, dim) inputs.
    run_case(8, 32)
    # Multi-row-tile path: parallel grid + column-partial merge (no padding).
    run_case(512, 32, tile_rows=256)
    # Ragged batch: padded + row/column-masked path.
    run_case(260, 32, tile_rows=128)
    # Very small temperature: guarded two-exp fallback path.
    run_case(8, 32, temperature=0.005, check_f32=False)

    print("KERNEL_OK")
</pallas_src>

<mosaic_0001>
module attributes {stable_mosaic.version = 11 : i64} {
  func.func @_contrastive_partials_kernel(%arg0: i32, %arg1: memref<8x32xf32, #tpu.memory_space<vmem>>, %arg2: memref<8x32xbf16, #tpu.memory_space<vmem>>, %arg3: memref<1x1x1xf32, #tpu.memory_space<vmem>>, %arg4: memref<1x1x1xf32, #tpu.memory_space<vmem>>, %arg5: memref<1x1x8xf32, #tpu.memory_space<vmem>>) attributes {dimension_semantics = [#tpu.dimension_semantics<parallel>], iteration_bounds = array<i64: 1>, scalar_prefetch = 0 : i64, scratch_operands = 0 : i64, tpu.core_type = #tpu.core_type<tc>, window_params = [{transform_indices = @transform_0, window_bounds = array<i64: 8, 32>}, {pipeline_mode = #tpu.pipeline_mode<synchronous>, transform_indices = @transform_1, window_bounds = array<i64: 8, 32>}, {transform_indices = @transform_2, window_bounds = array<i64: 1, 1, 1>}, {transform_indices = @transform_3, window_bounds = array<i64: 1, 1, 1>}, {transform_indices = @transform_4, window_bounds = array<i64: 1, 1, 8>}]} {
    %c0 = arith.constant 0 : index
    %c0_0 = arith.constant 0 : index
    %0 = vector.load %arg1[%c0, %c0_0] : memref<8x32xf32, #tpu.memory_space<vmem>>, vector<8x32xf32>
    %1 = arith.mulf %0, %0 : vector<8x32xf32>
    %cst = arith.constant dense<0.000000e+00> : vector<8xf32>
    %2 = vector.multi_reduction <add>, %1, %cst [1] : vector<8x32xf32> to vector<8xf32>
    %3 = vector.shape_cast %2 : vector<8xf32> to vector<8x1xf32>
    %cst_1 = arith.constant 1.000000e-24 : f32
    %4 = vector.broadcast %cst_1 : f32 to vector<8x1xf32>
    %5 = arith.maximumf %3, %4 : vector<8x1xf32>
    %6 = math.rsqrt %5 : vector<8x1xf32>
    %7 = vector.broadcast %6 : vector<8x1xf32> to vector<8x32xf32>
    %8 = arith.mulf %0, %7 : vector<8x32xf32>
    %cst_2 = arith.constant 14.2857141 : f32
    %9 = vector.broadcast %cst_2 : f32 to vector<8x32xf32>
    %10 = arith.mulf %8, %9 : vector<8x32xf32>
    %11 = arith.truncf %10 : vector<8x32xf32> to vector<8x32xbf16>
    %c0_3 = arith.constant 0 : index
    %c0_4 = arith.constant 0 : index
    %12 = vector.load %arg2[%c0_3, %c0_4] : memref<8x32xbf16, #tpu.memory_space<vmem>>, vector<8x32xbf16>
    %cst_5 = arith.constant dense<0.000000e+00> : vector<8x8xf32>
    %13 = tpu.matmul %11, %12, %cst_5 {dimension_numbers = #tpu.dot_dimension_numbers<[1], [1], [0], [0], [0, 0, 1, 0], [], []>} : vector<8x32xbf16>, vector<8x32xbf16>, vector<8x8xf32> -> vector<8x8xf32>
    %c0_6 = arith.constant 0 : index
    %c0_7 = arith.constant 0 : index
    %14 = vector.load %arg2[%c0_6, %c0_7] : memref<8x32xbf16, #tpu.memory_space<vmem>>, vector<8x32xbf16>
    %15 = arith.extf %11 : vector<8x32xbf16> to vector<8x32xf32>
    %16 = arith.extf %14 : vector<8x32xbf16> to vector<8x32xf32>
    %17 = arith.mulf %15, %16 : vector<8x32xf32>
    %cst_8 = arith.constant dense<0.000000e+00> : vector<8xf32>
    %18 = vector.multi_reduction <add>, %17, %cst_8 [1] : vector<8x32xf32> to vector<8xf32>
    %19 = vector.shape_cast %18 : vector<8xf32> to vector<8x1xf32>
    %cst_9 = arith.constant dense<0xFF800000> : vector<8xf32>
    %20 = vector.multi_reduction <maximumf>, %13, %cst_9 [1] : vector<8x8xf32> to vector<8xf32>
    %21 = vector.shape_cast %20 : vector<8xf32> to vector<8x1xf32>
    %cst_10 = arith.constant dense<0xFF800000> : vector<1xf32>
    %22 = vector.multi_reduction <maximumf>, %21, %cst_10 [0] : vector<8x1xf32> to vector<1xf32>
    %23 = vector.shape_cast %22 : vector<1xf32> to vector<1x1xf32>
    %24 = vector.broadcast %23 : vector<1x1xf32> to vector<8x8xf32>
    %25 = arith.subf %13, %24 : vector<8x8xf32>
    %26 = math.exp %25 : vector<8x8xf32>
    %cst_11 = arith.constant dense<0.000000e+00> : vector<8xf32>
    %27 = vector.multi_reduction <add>, %26, %cst_11 [1] : vector<8x8xf32> to vector<8xf32>
    %28 = vector.shape_cast %27 : vector<8xf32> to vector<8x1xf32>
    %29 = math.log %28 : vector<8x1xf32>
    %30 = vector.broadcast %23 : vector<1x1xf32> to vector<8x1xf32>
    %31 = arith.addf %30, %29 : vector<8x1xf32>
    %cst_12 = arith.constant 2.000000e+00 : f32
    %32 = vector.broadcast %cst_12 : f32 to vector<8x1xf32>
    %33 = arith.mulf %32, %19 : vector<8x1xf32>
    %34 = arith.subf %31, %33 : vector<8x1xf32>
    %cst_13 = arith.constant dense<0.000000e+00> : vector<1xf32>
    %35 = vector.multi_reduction <add>, %34, %cst_13 [0] : vector<8x1xf32> to vector<1xf32>
    %36 = vector.shape_cast %35 : vector<1xf32> to vector<1x1xf32>
    %37 = vector.shape_cast %36 : vector<1x1xf32> to vector<1x1x1xf32>
    %c0_14 = arith.constant 0 : index
    %c0_15 = arith.constant 0 : index
    %c0_16 = arith.constant 0 : index
    %38 = vector.load %arg3[%c0_14, %c0_15, %c0_16] : memref<1x1x1xf32, #tpu.memory_space<vmem>>, vector<1x1x1xf32>
    tpu.vector_store %arg3[%c0_14, %c0_15, %c0_16], %37 {strides = array<i32>} : memref<1x1x1xf32, #tpu.memory_space<vmem>>, vector<1x1x1xf32>,
    %39 = vector.shape_cast %23 : vector<1x1xf32> to vector<1x1x1xf32>
    %c0_17 = arith.constant 0 : index
    %c0_18 = arith.constant 0 : index
    %c0_19 = arith.constant 0 : index
    %40 = vector.load %arg4[%c0_17, %c0_18, %c0_19] : memref<1x1x1xf32, #tpu.memory_space<vmem>>, vector<1x1x1xf32>
    tpu.vector_store %arg4[%c0_17, %c0_18, %c0_19], %39 {strides = array<i32>} : memref<1x1x1xf32, #tpu.memory_space<vmem>>, vector<1x1x1xf32>,
    %cst_20 = arith.constant dense<0.000000e+00> : vector<8xf32>
    %41 = vector.multi_reduction <add>, %26, %cst_20 [0] : vector<8x8xf32> to vector<8xf32>
    %42 = vector.shape_cast %41 : vector<8xf32> to vector<1x8xf32>
    %43 = vector.shape_cast %42 : vector<1x8xf32> to vector<1x1x8xf32>
    %c0_21 = arith.constant 0 : index
    %c0_22 = arith.constant 0 : index
    %c0_23 = arith.constant 0 : index
    %44 = vector.load %arg5[%c0_21, %c0_22, %c0_23] : memref<1x1x8xf32, #tpu.memory_space<vmem>>, vector<1x1x8xf32>
    tpu.vector_store %arg5[%c0_21, %c0_22, %c0_23], %43 {strides = array<i32>} : memref<1x1x8xf32, #tpu.memory_space<vmem>>, vector<1x1x8xf32>,
    return
  }
  func.func @transform_0(%arg0: i32) -> (i32, i32) {
    %c0_i32 = arith.constant 0 : i32
    %c0_i32_0 = arith.constant 0 : i32
    return %arg0, %c0_i32 : i32, i32
  }
  func.func @transform_1(%arg0: i32) -> (i32, i32) {
    %c0_i32 = arith.constant 0 : i32
    %c0_i32_0 = arith.constant 0 : i32
    %c0_i32_1 = arith.constant 0 : i32
    return %c0_i32, %c0_i32_0 : i32, i32
  }
  func.func @transform_2(%arg0: i32) -> (i32, i32, i32) {
    %c0_i32 = arith.constant 0 : i32
    %c0_i32_0 = arith.constant 0 : i32
    %c0_i32_1 = arith.constant 0 : i32
    return %arg0, %c0_i32, %c0_i32_0 : i32, i32, i32
  }
  func.func @transform_3(%arg0: i32) -> (i32, i32, i32) {
    %c0_i32 = arith.constant 0 : i32
    %c0_i32_0 = arith.constant 0 : i32
    %c0_i32_1 = arith.constant 0 : i32
    return %arg0, %c0_i32, %c0_i32_0 : i32, i32, i32
  }
  func.func @transform_4(%arg0: i32) -> (i32, i32, i32) {
    %c0_i32 = arith.constant 0 : i32
    %c0_i32_0 = arith.constant 0 : i32
    %c0_i32_1 = arith.constant 0 : i32
    return %arg0, %c0_i32, %c0_i32_0 : i32, i32, i32
  }
}

module attributes {stable_mosaic.version = 11 : i64} {
  func.func @_contrastive_partials_kernel(%arg0: i32, %arg1: memref<8x32xf32, #tpu.memory_space<vmem>>, %arg2: memref<8x32xbf16, #tpu.memory_space<vmem>>, %arg3: memref<1x1x1xf32, #tpu.memory_space<vmem>>, %arg4: memref<1x1x1xf32, #tpu.memory_space<vmem>>, %arg5: memref<1x1x8xf32, #tpu.memory_space<vmem>>) attributes {dimension_semantics = [#tpu.dimension_semantics<parallel>], iteration_bounds = array<i64: 1>, scalar_prefetch = 0 : i64, scratch_operands = 0 : i64, tpu.core_type = #tpu.core_type<tc>, window_params = [{transform_indices = @transform_0, window_bounds = array<i64: 8, 32>}, {pipeline_mode = #tpu.pipeline_mode<synchronous>, transform_indices = @transform_1, window_bounds = array<i64: 8, 32>}, {transform_indices = @transform_2, window_bounds = array<i64: 1, 1, 1>}, {transform_indices = @transform_3, window_bounds = array<i64: 1, 1, 1>}, {transform_indices = @transform_4, window_bounds = array<i64: 1, 1, 8>}]} {
    %c0 = arith.constant 0 : index
    %c0_0 = arith.constant 0 : index
    %0 = vector.load %arg1[%c0, %c0_0] : memref<8x32xf32, #tpu.memory_space<vmem>>, vector<8x32xf32>
    %1 = arith.mulf %0, %0 : vector<8x32xf32>
    %cst = arith.constant dense<0.000000e+00> : vector<8xf32>
    %2 = vector.multi_reduction <add>, %1, %cst [1] : vector<8x32xf32> to vector<8xf32>
    %3 = vector.shape_cast %2 : vector<8xf32> to vector<8x1xf32>
    %cst_1 = arith.constant 1.000000e-24 : f32
    %4 = vector.broadcast %cst_1 : f32 to vector<8x1xf32>
    %5 = arith.maximumf %3, %4 : vector<8x1xf32>
    %6 = math.rsqrt %5 : vector<8x1xf32>
    %7 = vector.broadcast %6 : vector<8x1xf32> to vector<8x32xf32>
    %8 = arith.mulf %0, %7 : vector<8x32xf32>
    %cst_2 = arith.constant 14.2857141 : f32
    %9 = vector.broadcast %cst_2 : f32 to vector<8x32xf32>
    %10 = arith.mulf %8, %9 : vector<8x32xf32>
    %11 = arith.truncf %10 : vector<8x32xf32> to vector<8x32xbf16>
    %c0_3 = arith.constant 0 : index
    %c0_4 = arith.constant 0 : index
    %12 = vector.load %arg2[%c0_3, %c0_4] : memref<8x32xbf16, #tpu.memory_space<vmem>>, vector<8x32xbf16>
    %cst_5 = arith.constant dense<0.000000e+00> : vector<8x8xf32>
    %13 = tpu.matmul %11, %12, %cst_5 {dimension_numbers = #tpu.dot_dimension_numbers<[1], [1], [0], [0], [0, 0, 1, 0], [], []>} : vector<8x32xbf16>, vector<8x32xbf16>, vector<8x8xf32> -> vector<8x8xf32>
    %c0_6 = arith.constant 0 : index
    %c0_7 = arith.constant 0 : index
    %14 = vector.load %arg2[%c0_6, %c0_7] : memref<8x32xbf16, #tpu.memory_space<vmem>>, vector<8x32xbf16>
    %15 = arith.extf %11 : vector<8x32xbf16> to vector<8x32xf32>
    %16 = arith.extf %14 : vector<8x32xbf16> to vector<8x32xf32>
    %17 = arith.mulf %15, %16 : vector<8x32xf32>
    %cst_8 = arith.constant dense<0.000000e+00> : vector<8xf32>
    %18 = vector.multi_reduction <add>, %17, %cst_8 [1] : vector<8x32xf32> to vector<8xf32>
    %19 = vector.shape_cast %18 : vector<8xf32> to vector<8x1xf32>
    %cst_9 = arith.constant dense<0xFF800000> : vector<8xf32>
    %20 = vector.multi_reduction <maximumf>, %13, %cst_9 [1] : vector<8x8xf32> to vector<8xf32>
    %21 = vector.shape_cast %20 : vector<8xf32> to vector<8x1xf32>
    %cst_10 = arith.constant dense<0xFF800000> : vector<1xf32>
    %22 = vector.multi_reduction <maximumf>, %21, %cst_10 [0] : vector<8x1xf32> to vector<1xf32>
    %23 = vector.shape_cast %22 : vector<1xf32> to vector<1x1xf32>
    %24 = vector.broadcast %23 : vector<1x1xf32> to vector<8x8xf32>
    %25 = arith.subf %13, %24 : vector<8x8xf32>
    %26 = math.exp %25 : vector<8x8xf32>
    %cst_11 = arith.constant dense<0.000000e+00> : vector<8xf32>
    %27 = vector.multi_reduction <add>, %26, %cst_11 [1] : vector<8x8xf32> to vector<8xf32>
    %28 = vector.shape_cast %27 : vector<8xf32> to vector<8x1xf32>
    %29 = math.log %28 : vector<8x1xf32>
    %30 = vector.broadcast %23 : vector<1x1xf32> to vector<8x1xf32>
    %31 = arith.addf %30, %29 : vector<8x1xf32>
    %cst_12 = arith.constant 2.000000e+00 : f32
    %32 = vector.broadcast %cst_12 : f32 to vector<8x1xf32>
    %33 = arith.mulf %32, %19 : vector<8x1xf32>
    %34 = arith.subf %31, %33 : vector<8x1xf32>
    %cst_13 = arith.constant dense<0.000000e+00> : vector<1xf32>
    %35 = vector.multi_reduction <add>, %34, %cst_13 [0] : vector<8x1xf32> to vector<1xf32>
    %36 = vector.shape_cast %35 : vector<1xf32> to vector<1x1xf32>
    %37 = vector.shape_cast %36 : vector<1x1xf32> to vector<1x1x1xf32>
    %c0_14 = arith.constant 0 : index
    %c0_15 = arith.constant 0 : index
    %c0_16 = arith.constant 0 : index
    %38 = vector.load %arg3[%c0_14, %c0_15, %c0_16] : memref<1x1x1xf32, #tpu.memory_space<vmem>>, vector<1x1x1xf32>
    tpu.vector_store %arg3[%c0_14, %c0_15, %c0_16], %37 {strides = array<i32>} : memref<1x1x1xf32, #tpu.memory_space<vmem>>, vector<1x1x1xf32>,
    %39 = vector.shape_cast %23 : vector<1x1xf32> to vector<1x1x1xf32>
    %c0_17 = arith.constant 0 : index
    %c0_18 = arith.constant 0 : index
    %c0_19 = arith.constant 0 : index
    %40 = vector.load %arg4[%c0_17, %c0_18, %c0_19] : memref<1x1x1xf32, #tpu.memory_space<vmem>>, vector<1x1x1xf32>
    tpu.vector_store %arg4[%c0_17, %c0_18, %c0_19], %39 {strides = array<i32>} : memref<1x1x1xf32, #tpu.memory_space<vmem>>, vector<1x1x1xf32>,
    %cst_20 = arith.constant dense<0.000000e+00> : vector<8xf32>
    %41 = vector.multi_reduction <add>, %26, %cst_20 [0] : vector<8x8xf32> to vector<8xf32>
    %42 = vector.shape_cast %41 : vector<8xf32> to vector<1x8xf32>
    %43 = vector.shape_cast %42 : vector<1x8xf32> to vector<1x1x8xf32>
    %c0_21 = arith.constant 0 : index
    %c0_22 = arith.constant 0 : index
    %c0_23 = arith.constant 0 : index
    %44 = vector.load %arg5[%c0_21, %c0_22, %c0_23] : memref<1x1x8xf32, #tpu.memory_space<vmem>>, vector<1x1x8xf32>
    tpu.vector_store %arg5[%c0_21, %c0_22, %c0_23], %43 {strides = array<i32>} : memref<1x1x8xf32, #tpu.memory_space<vmem>>, vector<1x1x8xf32>,
    return
  }
  func.func @transform_0(%arg0: i32) -> (i32, i32) {
    %c0_i32 = arith.constant 0 : i32
    %c0_i32_0 = arith.constant 0 : i32
    return %arg0, %c0_i32 : i32, i32
  }
  func.func @transform_1(%arg0: i32) -> (i32, i32) {
    %c0_i32 = arith.constant 0 : i32
    %c0_i32_0 = arith.constant 0 : i32
    %c0_i32_1 = arith.constant 0 : i32
    return %c0_i32, %c0_i32_0 : i32, i32
  }
  func.func @transform_2(%arg0: i32) -> (i32, i32, i32) {
    %c0_i32 = arith.constant 0 : i32
    %c0_i32_0 = arith.constant 0 : i32
    %c0_i32_1 = arith.constant 0 : i32
    return %arg0, %c0_i32, %c0_i32_0 : i32, i32, i32
  }
  func.func @transform_3(%arg0: i32) -> (i32, i32, i32) {
    %c0_i32 = arith.constant 0 : i32
    %c0_i32_0 = arith.constant 0 : i32
    %c0_i32_1 = arith.constant 0 : i32
    return %arg0, %c0_i32, %c0_i32_0 : i32, i32, i32
  }
  func.func @transform_4(%arg0: i32) -> (i32, i32, i32) {
    %c0_i32 = arith.constant 0 : i32
    %c0_i32_0 = arith.constant 0 : i32
    %c0_i32_1 = arith.constant 0 : i32
    return %arg0, %c0_i32, %c0_i32_0 : i32, i32, i32
  }
}

</mosaic_0001>

<llo_original>
// kernel: tpu_custom_call.1
$region0: #{tpu_custom_call.1}
  #allocation0 [shape = 'u32[]', space=smem, size = 0x4, offset = 0x4, fixed_abs, tag = 'smem constant byte address 0x4 - core index']
  #allocation1 [shape = 'u32[144,128]{1,0:T(1,128)}', space=vmem, size = 0x12000, scoped, tag = 'internal scratch']
  %s0 = inlined_call_operand.hbm [shape: f32[8,32], index: 0, kind: input, shape index: {}]
  %s1 = inlined_call_operand.hbm [shape: bf16[8,32], index: 1, kind: input, shape index: {}]
  %s2 = inlined_call_operand.hbm [shape: f32[1,1,1], index: 2, kind: output, shape index: {0}]
  %s3 = inlined_call_operand.hbm [shape: f32[1,1,1], index: 3, kind: output, shape index: {1}]
  %s4 = inlined_call_operand.hbm [shape: f32[1,1,8], index: 4, kind: output, shape index: {2}]
  %5 = xla_tuple %s2, %s3, %s4
  %s6 = sld [smem:[#allocation0]]
  $region42: #{tpu_custom_call.1} parent=0
    _
  %s8 = ssub.s32 1, %s6
  %s9 = scalar_select 0, %s8, %s6
  $region1: #{tpu_custom_call.1} parent=0
    #allocation2 [shape = 'u8[4096]{0}', space=vmem, size = 0x1000, scoped, tag = 'input window, operand 0, single buffered']
    #allocation3 [shape = 's32[1]{0}', space=sflag, size = 0x4, scoped, tag = 'scoped memory for tpu_custom_call.1']
    #allocation4 [shape = 's32[1]{0}', space=sflag, size = 0x4, scoped, tag = 'scoped memory for tpu_custom_call.1']
    #allocation5 [shape = 'u8[2048]{0}', space=vmem, size = 0x800, scoped, tag = 'input window, operand 1, single buffered']
    #allocation6 [shape = 's32[1]{0}', space=sflag, size = 0x4, scoped, tag = 'scoped memory for tpu_custom_call.1']
    #allocation7 [shape = 'u8[512]{0}', space=vmem, size = 0x400, scoped, tag = 'output window, operand 0, single buffered']
    #allocation8 [shape = 'u8[512]{0}', space=vmem, size = 0x400, scoped, tag = 'output window, operand 1, single buffered']
    #allocation9 [shape = 's32[1]{0}', space=sflag, size = 0x4, scoped, tag = 'scoped memory for tpu_custom_call.1']
    #allocation10 [shape = 'u8[512]{0}', space=vmem, size = 0x400, scoped, tag = 'output window, operand 2, single buffered']
    %10 = vsyncpa [#allocation3], 0
    %11 = vsyncpa [#allocation6], 0
    %12 = vsyncpa [#allocation4], 0
    %13 = vsyncpa [#allocation9], 0
    // Predicated region
    $region2: #{tpu_custom_call.1} parent=1 // pred_check
      _
    $region3: #{tpu_custom_call.1} parent=1 // pred_check_branch
      %15 = sbr.rel (0) target = $region5
    $region4: #{tpu_custom_call.1} parent=1 // pred_region
      %s17 = ssub.s32 128, 128
      %18 = vsyncadd [#allocation3], %s17
      %s20 = sshll.u32 [#allocation2], 4
      %s21 = int_to_ptr.vmem [resolvable:$true] %s20
      %23 = dma.hbm_to_vmem [thread:$0]  %s0, 128, %s21, [#allocation3]
    $region5: #{tpu_custom_call.1} parent=1 // pred_fallthru
      _
    // Predicated region
    $region6: #{tpu_custom_call.1} parent=1 // pred_check
      _
    $region7: #{tpu_custom_call.1} parent=1 // pred_check_branch
      %25 = sbr.rel (0) target = $region9
    $region8: #{tpu_custom_call.1} parent=1 // pred_region
      %s27 = ssub.s32 64, 64
      %28 = vsyncadd [#allocation6], %s27
      %s30 = sshll.u32 [#allocation5], 4
      %s31 = int_to_ptr.vmem [resolvable:$true] %s30
      %33 = dma.hbm_to_vmem [thread:$0]  %s1, 64, %s31, [#allocation6]
    $region9: #{tpu_custom_call.1} parent=1 // pred_fallthru
      _
    // Predicated region
    $region10: #{tpu_custom_call.1} parent=1 // pred_check
      _
    $region11: #{tpu_custom_call.1} parent=1 // pred_check_branch
      %35 = sbr.rel (0) target = $region13
    $region12: #{tpu_custom_call.1} parent=1 // pred_region
      %36 = dma.done [#allocation3], 128
    $region13: #{tpu_custom_call.1} parent=1 // pred_fallthru
      _
    // Predicated region
    $region14: #{tpu_custom_call.1} parent=1 // pred_check
      _
    $region15: #{tpu_custom_call.1} parent=1 // pred_check_branch
      %38 = sbr.rel (0) target = $region17
    $region16: #{tpu_custom_call.1} parent=1 // pred_region
      %39 = dma.done [#allocation6], 64
    $region17: #{tpu_custom_call.1} parent=1 // pred_fallthru
      _
    %v41 = vld [vmem:[#allocation2] sm:$0xff]
    %v42 = vmul.f32 %v41, %v41
    %vm43 = vcmask 261120
    %v44 = vsel %vm43, %v42, 0.0
    %45 = vadd.xlane.f32.xlu0 %v44
    %v46 = vpop.xlane.xlu0 %45
    %v47 = vmax.f32 %v46, 1e-24
    %v48 = vrsqrt.pop %v47
    %v49 = vmul.f32 %v41, %v48
    %v50 = vmul.f32 %v49, 14.285714
    %v51 = vpack.c.bf16 %v50, %v50
    %v52 = vld [vmem:[#allocation5] sm:$0xf]
    %v54 = vsel %vm43, %v51, 0
    %v57 = vsel %vm43, %v52, 0
    %59 = vmatprep.subr.bf16.mxu0 0
    %60 = vmatpush1.bf16.xpose.msra.mxu0 %v57
    %61 = vmatprep.subr.bf16.mxu0 0
    %62 = vmatpush1.bf16.xpose.msra.mxu0 0
    %63 = vmatprep.subr.bf16.mxu0 0
    %64 = vmatpush1.bf16.xpose.msra.mxu0 0
    %65 = vmatprep.subr.bf16.mxu0 0
    %66 = vmatpush1.bf16.xpose.msra.mxu0 0
    %67 = vmatprep.subr.bf16.mxu0 0
    %68 = vmatpush1.bf16.xpose.msra.mxu0 0
    %69 = vmatprep.subr.bf16.mxu0 0
    %70 = vmatpush1.bf16.xpose.msra.mxu0 0
    %71 = vmatprep.subr.bf16.mxu0 0
    %72 = vmatpush1.bf16.xpose.msra.mxu0 0
    %73 = vmatprep.subr.bf16.mxu0 0
    %74 = vmatpush1.bf16.xpose.msra.mxu0 0
    %75 = vmatprep.subr.bf16.mxu0 0
    %76 = vmatpush1.bf16.xpose.msra.mxu0 0
    %77 = vmatprep.subr.bf16.mxu0 0
    %78 = vmatpush1.bf16.xpose.msra.mxu0 0
    %79 = vmatprep.subr.bf16.mxu0 0
    %80 = vmatpush1.bf16.xpose.msra.mxu0 0
    %81 = vmatprep.subr.bf16.mxu0 0
    %82 = vmatpush1.bf16.xpose.msra.mxu0 0
    %83 = vmatprep.subr.bf16.mxu0 0
    %84 = vmatpush1.bf16.xpose.msra.mxu0 0
    %85 = vmatprep.subr.bf16.mxu0 0
    %86 = vmatpush1.bf16.xpose.msra.mxu0 0
    %87 = vmatprep.subr.bf16.mxu0 0
    %88 = vmatpush1.bf16.xpose.msra.mxu0 0
    %89 = vmatprep.subr.bf16.mxu0 0
    %90 = vmatpush1.bf16.xpose.msra.mxu0 0
    %91 = vmatprep.mubr.bf16.mxu0 0
    %92 = vmatmul.mubr.bf16.gmra.mrb[0].mxu0 %v54
    %v93 = vpop.f32.mrb[0].mxu0
    %v94 = vadd.f32 0.0, %v93
    %v95 = vpop.f32.mrb[0].mxu0
    %v96 = vpop.f32.mrb[0].mxu0
    %v97 = vpop.f32.mrb[0].mxu0
    %98 = vdwg.mxu0
    %v99 = vunpack.c.l.bf16 %v51
    %v100 = vunpack.c.l.bf16 %v52
    %v101 = vmul.f32 %v99, %v100
    %v102 = vsel %vm43, %v101, 0.0
    %103 = vadd.xlane.f32.xlu0 %v102
    %v104 = vpop.xlane.xlu0 %103
    %vm105 = vcmask 64512
    %v106 = vsel %vm105, %v94, -inf
    %107 = vmax.xlane.f32.xlu0 %v106
    %v108 = vpop.xlane.xlu0 %107
    %v109 = vrot.slane %v108, 4
    %v110 = vmax.f32 %v108, %v109
    %v111 = vrot.slane %v110, 2
    %v112 = vmax.f32 %v110, %v111
    %v113 = vrot.slane %v112, 1
    %v114 = vmax.f32 %v112, %v113
    %v115 = vsub.f32 %v94, %v114
    %v116 = vmul.f32 %v115, 1.442695
    %v117 = vpow.pop %v116
    %v118 = vsel %vm105, %v117, 0.0
    %119 = vadd.xlane.f32.xlu0 %v118
    %v120 = vpop.xlane.xlu0 %119
    %v121 = vlog2.pop %v120
    %v122 = vmul.f32 %v121, 0.6931472
    %v123 = vadd.f32 %v114, %v122
    %v124 = vmul.f32 %v104, 2.0
    %v125 = vsub.f32 %v123, %v124
    %v126 = vrot.slane %v125, 4
    %v127 = vadd.f32 %v125, %v126
    %v128 = vrot.slane %v127, 2
    %v129 = vadd.f32 %v127, %v128
    %v130 = vrot.slane %v129, 1
    %v131 = vadd.f32 %v129, %v130
    %vm132 = vcmask 0
    %133 = vst.msk [vmem:[#allocation7] sm:$0x1] %vm132, %v131
    %134 = vst.msk [vmem:[#allocation8] sm:$0x1] %vm132, %v114
    %v135 = vrot.slane %v118, 4
    %v136 = vadd.f32 %v118, %v135
    %v137 = vrot.slane %v136, 2
    %v138 = vadd.f32 %v136, %v137
    %v139 = vrot.slane %v138, 1
    %v140 = vadd.f32 %v138, %v139
    %vm141 = vcmask 57344
    %142 = vst.msk [vmem:[#allocation10] sm:$0x1] %vm141, %v140
    // Predicated region
    $region18: #{tpu_custom_call.1} parent=1 // pred_check
      _
    $region19: #{tpu_custom_call.1} parent=1 // pred_check_branch
      %144 = sbr.rel (0) target = $region21
    $region20: #{tpu_custom_call.1} parent=1 // pred_region
      %s146 = ssub.s32 16, 16
      %147 = vsyncadd [#allocation4], %s146
      %s149 = sshll.u32 [#allocation7], 4
      %s150 = int_to_ptr.vmem [resolvable:$true] %s149
      %152 = dma.vmem_to_hbm [thread:$0]  %s150, 16, %s2, [#allocation4]
    $region21: #{tpu_custom_call.1} parent=1 // pred_fallthru
      _
    // Predicated region
    $region22: #{tpu_custom_call.1} parent=1 // pred_check
      _
    $region23: #{tpu_custom_call.1} parent=1 // pred_check_branch
      %154 = sbr.rel (0) target = $region25
    $region24: #{tpu_custom_call.1} parent=1 // pred_region
      %s156 = ssub.s32 16, 16
      %157 = vsyncadd [#allocation9], %s156
      %s159 = sshll.u32 [#allocation8], 4
      %s160 = int_to_ptr.vmem [resolvable:$true] %s159
      %162 = dma.vmem_to_hbm [thread:$0]  %s160, 16, %s3, [#allocation9]
    $region25: #{tpu_custom_call.1} parent=1 // pred_fallthru
      _
    // Predicated region
    $region26: #{tpu_custom_call.1} parent=1 // pred_check
      _
    $region27: #{tpu_custom_call.1} parent=1 // pred_check_branch
      %164 = sbr.rel (0) target = $region29
    $region28: #{tpu_custom_call.1} parent=1 // pred_region
      %s166 = ssub.s32 16, 16
      %167 = vsyncadd [#allocation9], %s166
      %s169 = sshll.u32 [#allocation10], 4
      %s170 = int_to_ptr.vmem [resolvable:$true] %s169
      %172 = dma.vmem_to_hbm [thread:$0]  %s170, 16, %s4, [#allocation9]
    $region29: #{tpu_custom_call.1} parent=1 // pred_fallthru
      _
    // Predicated region
    $region30: #{tpu_custom_call.1} parent=1 // pred_check
      _
    $region31: #{tpu_custom_call.1} parent=1 // pred_check_branch
      %174 = sbr.rel (0) target = $region33
    $region32: #{tpu_custom_call.1} parent=1 // pred_region
      %175 = dma.done [#allocation4], 16
    $region33: #{tpu_custom_call.1} parent=1 // pred_fallthru
      _
    // Predicated region
    $region34: #{tpu_custom_call.1} parent=1 // pred_check
      _
    $region35: #{tpu_custom_call.1} parent=1 // pred_check_branch
      %177 = sbr.rel (0) target = $region37
    $region36: #{tpu_custom_call.1} parent=1 // pred_region
      %178 = dma.done [#allocation9], 16
    $region37: #{tpu_custom_call.1} parent=1 // pred_fallthru
      _
    // Predicated region
    $region38: #{tpu_custom_call.1} parent=1 // pred_check
      _
    $region39: #{tpu_custom_call.1} parent=1 // pred_check_branch
      %180 = sbr.rel (0) target = $region41
    $region40: #{tpu_custom_call.1} parent=1 // pred_region
      %181 = dma.done [#allocation9], 16
    $region41: #{tpu_custom_call.1} parent=1 // pred_fallthru
      _
    %182 = vsyncpa [#allocation3], 1
    %183 = vsyncpa [#allocation6], 1
    %184 = vsyncpa [#allocation4], 1
    %185 = vsyncpa [#allocation9], 1

// kernel: tpu_custom_call.1
$region0: #{tpu_custom_call.1}
  #allocation0 [shape = 'u32[]', space=smem, size = 0x4, offset = 0x4, fixed_abs, tag = 'smem constant byte address 0x4 - core index']
  #allocation1 [shape = 'u32[144,128]{1,0:T(1,128)}', space=vmem, size = 0x12000, scoped, tag = 'internal scratch']
  %s0 = inlined_call_operand.hbm [shape: f32[8,32], index: 0, kind: input, shape index: {}]
  %s1 = inlined_call_operand.hbm [shape: bf16[8,32], index: 1, kind: input, shape index: {}]
  %s2 = inlined_call_operand.hbm [shape: f32[1,1,1], index: 2, kind: output, shape index: {0}]
  %s3 = inlined_call_operand.hbm [shape: f32[1,1,1], index: 3, kind: output, shape index: {1}]
  %s4 = inlined_call_operand.hbm [shape: f32[1,1,8], index: 4, kind: output, shape index: {2}]
  %5 = xla_tuple %s2, %s3, %s4
  %s6 = sld [smem:[#allocation0]]
  $region42: #{tpu_custom_call.1} parent=0
    _
  %s8 = ssub.s32 1, %s6
  %s9 = scalar_select 0, %s8, %s6
  $region1: #{tpu_custom_call.1} parent=0
    #allocation2 [shape = 'u8[4096]{0}', space=vmem, size = 0x1000, scoped, tag = 'input window, operand 0, single buffered']
    #allocation3 [shape = 's32[1]{0}', space=sflag, size = 0x4, scoped, tag = 'scoped memory for tpu_custom_call.1']
    #allocation4 [shape = 's32[1]{0}', space=sflag, size = 0x4, scoped, tag = 'scoped memory for tpu_custom_call.1']
    #allocation5 [shape = 'u8[2048]{0}', space=vmem, size = 0x800, scoped, tag = 'input window, operand 1, single buffered']
    #allocation6 [shape = 's32[1]{0}', space=sflag, size = 0x4, scoped, tag = 'scoped memory for tpu_custom_call.1']
    #allocation7 [shape = 'u8[512]{0}', space=vmem, size = 0x400, scoped, tag = 'output window, operand 0, single buffered']
    #allocation8 [shape = 'u8[512]{0}', space=vmem, size = 0x400, scoped, tag = 'output window, operand 1, single buffered']
    #allocation9 [shape = 's32[1]{0}', space=sflag, size = 0x4, scoped, tag = 'scoped memory for tpu_custom_call.1']
    #allocation10 [shape = 'u8[512]{0}', space=vmem, size = 0x400, scoped, tag = 'output window, operand 2, single buffered']
    %10 = vsyncpa [#allocation3], 0
    %11 = vsyncpa [#allocation6], 0
    %12 = vsyncpa [#allocation4], 0
    %13 = vsyncpa [#allocation9], 0
    // Predicated region
    $region2: #{tpu_custom_call.1} parent=1 // pred_check
      _
    $region3: #{tpu_custom_call.1} parent=1 // pred_check_branch
      %15 = sbr.rel (0) target = $region5
    $region4: #{tpu_custom_call.1} parent=1 // pred_region
      %s17 = ssub.s32 128, 128
      %18 = vsyncadd [#allocation3], %s17
      %s20 = sshll.u32 [#allocation2], 4
      %s21 = int_to_ptr.vmem [resolvable:$true] %s20
      %23 = dma.hbm_to_vmem [thread:$0]  %s0, 128, %s21, [#allocation3]
    $region5: #{tpu_custom_call.1} parent=1 // pred_fallthru
      _
    // Predicated region
    $region6: #{tpu_custom_call.1} parent=1 // pred_check
      _
    $region7: #{tpu_custom_call.1} parent=1 // pred_check_branch
      %25 = sbr.rel (0) target = $region9
    $region8: #{tpu_custom_call.1} parent=1 // pred_region
      %s27 = ssub.s32 64, 64
      %28 = vsyncadd [#allocation6], %s27
      %s30 = sshll.u32 [#allocation5], 4
      %s31 = int_to_ptr.vmem [resolvable:$true] %s30
      %33 = dma.hbm_to_vmem [thread:$0]  %s1, 64, %s31, [#allocation6]
    $region9: #{tpu_custom_call.1} parent=1 // pred_fallthru
      _
    // Predicated region
    $region10: #{tpu_custom_call.1} parent=1 // pred_check
      _
    $region11: #{tpu_custom_call.1} parent=1 // pred_check_branch
      %35 = sbr.rel (0) target = $region13
    $region12: #{tpu_custom_call.1} parent=1 // pred_region
      %36 = dma.done [#allocation3], 128
    $region13: #{tpu_custom_call.1} parent=1 // pred_fallthru
      _
    // Predicated region
    $region14: #{tpu_custom_call.1} parent=1 // pred_check
      _
    $region15: #{tpu_custom_call.1} parent=1 // pred_check_branch
      %38 = sbr.rel (0) target = $region17
    $region16: #{tpu_custom_call.1} parent=1 // pred_region
      %39 = dma.done [#allocation6], 64
    $region17: #{tpu_custom_call.1} parent=1 // pred_fallthru
      _
    %v41 = vld [vmem:[#allocation2] sm:$0xff]
    %v42 = vmul.f32 %v41, %v41
    %vm43 = vcmask 261120
    %v44 = vsel %vm43, %v42, 0.0
    %45 = vadd.xlane.f32.xlu0 %v44
    %v46 = vpop.xlane.xlu0 %45
    %v47 = vmax.f32 %v46, 1e-24
    %v48 = vrsqrt.pop %v47
    %v49 = vmul.f32 %v41, %v48
    %v50 = vmul.f32 %v49, 14.285714
    %v51 = vpack.c.bf16 %v50, %v50
    %v52 = vld [vmem:[#allocation5] sm:$0xf]
    %v54 = vsel %vm43, %v51, 0
    %v57 = vsel %vm43, %v52, 0
    %59 = vmatprep.subr.bf16.mxu0 0
    %60 = vmatpush1.bf16.xpose.msra.mxu0 %v57
    %61 = vmatprep.subr.bf16.mxu0 0
    %62 = vmatpush1.bf16.xpose.msra.mxu0 0
    %63 = vmatprep.subr.bf16.mxu0 0
    %64 = vmatpush1.bf16.xpose.msra.mxu0 0
    %65 = vmatprep.subr.bf16.mxu0 0
    %66 = vmatpush1.bf16.xpose.msra.mxu0 0
    %67 = vmatprep.subr.bf16.mxu0 0
    %68 = vmatpush1.bf16.xpose.msra.mxu0 0
    %69 = vmatprep.subr.bf16.mxu0 0
    %70 = vmatpush1.bf16.xpose.msra.mxu0 0
    %71 = vmatprep.subr.bf16.mxu0 0
    %72 = vmatpush1.bf16.xpose.msra.mxu0 0
    %73 = vmatprep.subr.bf16.mxu0 0
    %74 = vmatpush1.bf16.xpose.msra.mxu0 0
    %75 = vmatprep.subr.bf16.mxu0 0
    %76 = vmatpush1.bf16.xpose.msra.mxu0 0
    %77 = vmatprep.subr.bf16.mxu0 0
    %78 = vmatpush1.bf16.xpose.msra.mxu0 0
    %79 = vmatprep.subr.bf16.mxu0 0
    %80 = vmatpush1.bf16.xpose.msra.mxu0 0
    %81 = vmatprep.subr.bf16.mxu0 0
    %82 = vmatpush1.bf16.xpose.msra.mxu0 0
    %83 = vmatprep.subr.bf16.mxu0 0
    %84 = vmatpush1.bf16.xpose.msra.mxu0 0
    %85 = vmatprep.subr.bf16.mxu0 0
    %86 = vmatpush1.bf16.xpose.msra.mxu0 0
    %87 = vmatprep.subr.bf16.mxu0 0
    %88 = vmatpush1.bf16.xpose.msra.mxu0 0
    %89 = vmatprep.subr.bf16.mxu0 0
    %90 = vmatpush1.bf16.xpose.msra.mxu0 0
    %91 = vmatprep.mubr.bf16.mxu0 0
    %92 = vmatmul.mubr.bf16.gmra.mrb[0].mxu0 %v54
    %v93 = vpop.f32.mrb[0].mxu0
    %v94 = vadd.f32 0.0, %v93
    %v95 = vpop.f32.mrb[0].mxu0
    %v96 = vpop.f32.mrb[0].mxu0
    %v97 = vpop.f32.mrb[0].mxu0
    %98 = vdwg.mxu0
    %v99 = vunpack.c.l.bf16 %v51
    %v100 = vunpack.c.l.bf16 %v52
    %v101 = vmul.f32 %v99, %v100
    %v102 = vsel %vm43, %v101, 0.0
    %103 = vadd.xlane.f32.xlu0 %v102
    %v104 = vpop.xlane.xlu0 %103
    %vm105 = vcmask 64512
    %v106 = vsel %vm105, %v94, -inf
    %107 = vmax.xlane.f32.xlu0 %v106
    %v108 = vpop.xlane.xlu0 %107
    %v109 = vrot.slane %v108, 4
    %v110 = vmax.f32 %v108, %v109
    %v111 = vrot.slane %v110, 2
    %v112 = vmax.f32 %v110, %v111
    %v113 = vrot.slane %v112, 1
    %v114 = vmax.f32 %v112, %v113
    %v115 = vsub.f32 %v94, %v114
    %v116 = vmul.f32 %v115, 1.442695
    %v117 = vpow.pop %v116
    %v118 = vsel %vm105, %v117, 0.0
    %119 = vadd.xlane.f32.xlu0 %v118
    %v120 = vpop.xlane.xlu0 %119
    %v121 = vlog2.pop %v120
    %v122 = vmul.f32 %v121, 0.6931472
    %v123 = vadd.f32 %v114, %v122
    %v124 = vmul.f32 %v104, 2.0
    %v125 = vsub.f32 %v123, %v124
    %v126 = vrot.slane %v125, 4
    %v127 = vadd.f32 %v125, %v126
    %v128 = vrot.slane %v127, 2
    %v129 = vadd.f32 %v127, %v128
    %v130 = vrot.slane %v129, 1
    %v131 = vadd.f32 %v129, %v130
    %vm132 = vcmask 0
    %133 = vst.msk [vmem:[#allocation7] sm:$0x1] %vm132, %v131
    %134 = vst.msk [vmem:[#allocation8] sm:$0x1] %vm132, %v114
    %v135 = vrot.slane %v118, 4
    %v136 = vadd.f32 %v118, %v135
    %v137 = vrot.slane %v136, 2
    %v138 = vadd.f32 %v136, %v137
    %v139 = vrot.slane %v138, 1
    %v140 = vadd.f32 %v138, %v139
    %vm141 = vcmask 57344
    %142 = vst.msk [vmem:[#allocation10] sm:$0x1] %vm141, %v140
    // Predicated region
    $region18: #{tpu_custom_call.1} parent=1 // pred_check
      _
    $region19: #{tpu_custom_call.1} parent=1 // pred_check_branch
      %144 = sbr.rel (0) target = $region21
    $region20: #{tpu_custom_call.1} parent=1 // pred_region
      %s146 = ssub.s32 16, 16
      %147 = vsyncadd [#allocation4], %s146
      %s149 = sshll.u32 [#allocation7], 4
      %s150 = int_to_ptr.vmem [resolvable:$true] %s149
      %152 = dma.vmem_to_hbm [thread:$0]  %s150, 16, %s2, [#allocation4]
    $region21: #{tpu_custom_call.1} parent=1 // pred_fallthru
      _
    // Predicated region
    $region22: #{tpu_custom_call.1} parent=1 // pred_check
      _
    $region23: #{tpu_custom_call.1} parent=1 // pred_check_branch
      %154 = sbr.rel (0) target = $region25
    $region24: #{tpu_custom_call.1} parent=1 // pred_region
      %s156 = ssub.s32 16, 16
      %157 = vsyncadd [#allocation9], %s156
      %s159 = sshll.u32 [#allocation8], 4
      %s160 = int_to_ptr.vmem [resolvable:$true] %s159
      %162 = dma.vmem_to_hbm [thread:$0]  %s160, 16, %s3, [#allocation9]
    $region25: #{tpu_custom_call.1} parent=1 // pred_fallthru
      _
    // Predicated region
    $region26: #{tpu_custom_call.1} parent=1 // pred_check
      _
    $region27: #{tpu_custom_call.1} parent=1 // pred_check_branch
      %164 = sbr.rel (0) target = $region29
    $region28: #{tpu_custom_call.1} parent=1 // pred_region
      %s166 = ssub.s32 16, 16
      %167 = vsyncadd [#allocation9], %s166
      %s169 = sshll.u32 [#allocation10], 4
      %s170 = int_to_ptr.vmem [resolvable:$true] %s169
      %172 = dma.vmem_to_hbm [thread:$0]  %s170, 16, %s4, [#allocation9]
    $region29: #{tpu_custom_call.1} parent=1 // pred_fallthru
      _
    // Predicated region
    $region30: #{tpu_custom_call.1} parent=1 // pred_check
      _
    $region31: #{tpu_custom_call.1} parent=1 // pred_check_branch
      %174 = sbr.rel (0) target = $region33
    $region32: #{tpu_custom_call.1} parent=1 // pred_region
      %175 = dma.done [#allocation4], 16
    $region33: #{tpu_custom_call.1} parent=1 // pred_fallthru
      _
    // Predicated region
    $region34: #{tpu_custom_call.1} parent=1 // pred_check
      _
    $region35: #{tpu_custom_call.1} parent=1 // pred_check_branch
      %177 = sbr.rel (0) target = $region37
    $region36: #{tpu_custom_call.1} parent=1 // pred_region
      %178 = dma.done [#allocation9], 16
    $region37: #{tpu_custom_call.1} parent=1 // pred_fallthru
      _
    // Predicated region
    $region38: #{tpu_custom_call.1} parent=1 // pred_check
      _
    $region39: #{tpu_custom_call.1} parent=1 // pred_check_branch
      %180 = sbr.rel (0) target = $region41
    $region40: #{tpu_custom_call.1} parent=1 // pred_region
      %181 = dma.done [#allocation9], 16
    $region41: #{tpu_custom_call.1} parent=1 // pred_fallthru
      _
    %182 = vsyncpa [#allocation3], 1
    %183 = vsyncpa [#allocation6], 1
    %184 = vsyncpa [#allocation4], 1
    %185 = vsyncpa [#allocation9], 1

</llo_original>
